<compile_context>
chip_gen: v7x
topology: tpu7x:2x2x1
jax: 0.10.0
libtpu: 0.0.40
codegen_flags: <defaults>
</compile_context>

<pallas_src>
import functools
import math

import jax
import jax.numpy as jnp
from jax.experimental import pallas as pl
from jax.experimental.pallas import tpu as pltpu


# ----------------------------------------------------------------------------
# helpers
# ----------------------------------------------------------------------------
def _full_spec(shape):
    """BlockSpec covering the whole array (single grid point)."""
    nd = len(shape)
    return pl.BlockSpec(shape, lambda *_: (0,) * nd)


# ----------------------------------------------------------------------------
# Fused DGI kernel: encoder (2 GCN layers) x 2 branches + readout + disc + BCE
# ----------------------------------------------------------------------------
def _dgi_fused_kernel(a_ref, fp_ref, fn_ref, w0_ref, b0_ref, w1_ref, b1_ref,
                      wd_ref, o_ref):
    a = a_ref[...]            # (N, N)  symmetric-normalized adjacency
    w0 = w0_ref[...]          # (F, D)
    b0 = b0_ref[...]          # (1, D)
    w1 = w1_ref[...]          # (D, D)
    b1 = b1_ref[...]          # (1, D)

    def encode(feat):
        # Layer 0 (reassociated): A @ (H @ W0) + b0, ReLU.
        hw = jnp.dot(feat, w0, preferred_element_type=jnp.float32)       # (N, D)
        h = jnp.dot(a, hw, preferred_element_type=jnp.float32) + b0
        h = jnp.maximum(h, 0.0)
        # Layer 1: A @ (H @ W1) + b1, no activation.
        hw = jnp.dot(h, w1, preferred_element_type=jnp.float32)
        return jnp.dot(a, hw, preferred_element_type=jnp.float32) + b1   # (N, D)

    hp = encode(fp_ref[...])          # positive embeddings  (N, D)
    hn = encode(fn_ref[...])          # corrupted embeddings (N, D)

    # MeanReadout: summary = sigmoid(mean over nodes) -> (1, D)
    summary = jax.nn.sigmoid(jnp.mean(hp, axis=0, keepdims=True))

    # Discriminator with summary folded into the weight once:
    #   logits = H @ (W_d @ s)   where   (W_d @ s)[d] = (summary @ W_d^T)[d]
    ws = jnp.dot(summary, wd_ref[...].T,
                 preferred_element_type=jnp.float32)                     # (1, D)
    pos = jnp.sum(hp * ws, axis=-1, keepdims=True)                       # (N, 1)
    neg = jnp.sum(hn * ws, axis=-1, keepdims=True)                       # (N, 1)

    # BCEWithLogitsLoss (mean reduction), numerically-stable softplus:
    #   target=1 : softplus(-x)    target=0 : softplus(x)
    def softplus(x):
        return jnp.maximum(x, 0.0) + jnp.log1p(jnp.exp(-jnp.abs(x)))

    l1 = jnp.mean(softplus(-pos), keepdims=True)                         # (1, 1)
    l2 = jnp.mean(softplus(neg), keepdims=True)                          # (1, 1)
    loss = l1 + l2

    # Lane-dense store: broadcast the scalar loss into a (1, 128) slab.
    o_ref[...] = jnp.broadcast_to(loss, (1, 128))


def dgi_fused(a_norm, feat_pos, feat_neg, w0, b0, w1, b1, wd):
    out = pl.pallas_call(
        _dgi_fused_kernel,
        grid=(1,),
        in_specs=[_full_spec(a_norm.shape), _full_spec(feat_pos.shape),
                  _full_spec(feat_neg.shape),
                  _full_spec(w0.shape), _full_spec(b0.shape),
                  _full_spec(w1.shape), _full_spec(b1.shape),
                  _full_spec(wd.shape)],
        out_specs=_full_spec((1, 128)),
        out_shape=jax.ShapeDtypeStruct((1, 128), jnp.float32),
        compiler_params=pltpu.CompilerParams(
            dimension_semantics=("arbitrary",),
            vmem_limit_bytes=32 * 1024 * 1024),
    )(a_norm, feat_pos, feat_neg, w0, b0, w1, b1, wd)
    return out[0, 0]


# ----------------------------------------------------------------------------
# DGI model (parameters + forward) in plain-JAX glue calling the fused kernel
# ----------------------------------------------------------------------------
def init_params(key, in_feats, n_hidden, cls_in=768, cls_out=24):
    ks = jax.random.split(key, 8)

    def unif(k, shape, fan_in):
        bound = 1.0 / math.sqrt(fan_in)
        return jax.random.uniform(k, shape, jnp.float32, -bound, bound)

    params = {
        # GCN (DGL-style): input layer (in_feats -> n_hidden, ReLU)
        #                + output layer (n_hidden -> n_hidden, no activation)
        "gcn_w0": unif(ks[0], (in_feats, n_hidden), in_feats),
        "gcn_b0": jnp.zeros((1, n_hidden), jnp.float32),
        "gcn_w1": unif(ks[1], (n_hidden, n_hidden), n_hidden),
        "gcn_b1": jnp.zeros((1, n_hidden), jnp.float32),
        # Discriminator bilinear weight, uniform(-1/sqrt(D), 1/sqrt(D))
        "disc_w": unif(ks[2], (n_hidden, n_hidden), n_hidden),
        # LogisticRegression(768, 24) parameters are kept for parity with the
        # reference module, but its output is unused in the forward loss, so the
        # matmul is elided (dead code in the reference forward).
        "cls_wt": unif(ks[3], (cls_in, cls_out), cls_in),
        "cls_b": unif(ks[4], (1, cls_out), cls_in),
    }
    return params


def self_mutual_info(params, feature, a_norm, perm_key):
    # corrupt=True branch: row-permute the input features (torch.randperm
    # equivalent, done deterministically in glue).
    perm = jax.random.permutation(perm_key, feature.shape[0])
    feat_neg = feature[perm]
    # TODO(synk): dropout is a no-op here (p=0 / eval-mode semantics).
    return dgi_fused(a_norm, feature, feat_neg,
                     params["gcn_w0"], params["gcn_b0"],
                     params["gcn_w1"], params["gcn_b1"],
                     params["disc_w"])


@jax.jit
def dgi_forward(params, features_list, a_norm_list, perm_key):
    assert len(features_list) == len(a_norm_list)
    keys = jax.random.split(perm_key, len(features_list))
    total = jnp.float32(0.0)
    for f, a, k in zip(features_list, a_norm_list, keys):
        total = total + self_mutual_info(params, f, a, k)
    return total


# ----------------------------------------------------------------------------
# main
# ----------------------------------------------------------------------------
if __name__ == "__main__":
    key = jax.random.PRNGKey(0)
    k_param, k_feat, k_adj, k_perm = jax.random.split(key, 4)

    N = 8           # number of graph nodes
    IN_FEATS = 768  # matches the hard-coded LogisticRegression(768, 24)
    N_HIDDEN = 32

    # deterministic node features
    features = jax.random.normal(k_feat, (N, IN_FEATS), jnp.float32)

    # deterministic random graph -> symmetric-normalized dense adjacency w/ self-loops
    adj = (jax.random.uniform(k_adj, (N, N)) < 0.4).astype(jnp.float32)
    adj = jnp.maximum(adj, adj.T)
    adj = adj + jnp.eye(N, dtype=jnp.float32)
    deg = jnp.sum(adj, axis=1)
    d_inv_sqrt = 1.0 / jnp.sqrt(deg)
    a_norm = adj * d_inv_sqrt[:, None] * d_inv_sqrt[None, :]

    params = init_params(k_param, IN_FEATS, N_HIDDEN)

    loss = dgi_forward(params, [features], [a_norm], k_perm)
    loss = jax.block_until_ready(loss)
    assert jnp.isfinite(loss)
    print("KERNEL_OK")
</pallas_src>

<mosaic_0001>
module attributes {stable_mosaic.version = 11 : i64} {
  func.func @_dgi_fused_kernel(%arg0: i32, %arg1: memref<8x8xf32, #tpu.memory_space<vmem>>, %arg2: memref<8x768xf32, #tpu.memory_space<vmem>>, %arg3: memref<8x768xf32, #tpu.memory_space<vmem>>, %arg4: memref<768x32xf32, #tpu.memory_space<vmem>>, %arg5: memref<1x32xf32, #tpu.memory_space<vmem>>, %arg6: memref<32x32xf32, #tpu.memory_space<vmem>>, %arg7: memref<1x32xf32, #tpu.memory_space<vmem>>, %arg8: memref<32x32xf32, #tpu.memory_space<vmem>>, %arg9: memref<1x128xf32, #tpu.memory_space<vmem>>) attributes {dimension_semantics = [#tpu.dimension_semantics<arbitrary>], iteration_bounds = array<i64: 1>, scalar_prefetch = 0 : i64, scratch_operands = 0 : i64, tpu.core_type = #tpu.core_type<tc>, window_params = [{pipeline_mode = #tpu.pipeline_mode<synchronous>, transform_indices = @transform_0, window_bounds = array<i64: 8, 8>}, {pipeline_mode = #tpu.pipeline_mode<synchronous>, transform_indices = @transform_1, window_bounds = array<i64: 8, 768>}, {pipeline_mode = #tpu.pipeline_mode<synchronous>, transform_indices = @transform_2, window_bounds = array<i64: 8, 768>}, {pipeline_mode = #tpu.pipeline_mode<synchronous>, transform_indices = @transform_3, window_bounds = array<i64: 768, 32>}, {pipeline_mode = #tpu.pipeline_mode<synchronous>, transform_indices = @transform_4, window_bounds = array<i64: 1, 32>}, {pipeline_mode = #tpu.pipeline_mode<synchronous>, transform_indices = @transform_5, window_bounds = array<i64: 32, 32>}, {pipeline_mode = #tpu.pipeline_mode<synchronous>, transform_indices = @transform_6, window_bounds = array<i64: 1, 32>}, {pipeline_mode = #tpu.pipeline_mode<synchronous>, transform_indices = @transform_7, window_bounds = array<i64: 32, 32>}, {pipeline_mode = #tpu.pipeline_mode<synchronous>, transform_indices = @transform_8, window_bounds = array<i64: 1, 128>}]} {
    %c0 = arith.constant 0 : index
    %c0_0 = arith.constant 0 : index
    %0 = vector.load %arg1[%c0, %c0_0] : memref<8x8xf32, #tpu.memory_space<vmem>>, vector<8x8xf32>
    %c0_1 = arith.constant 0 : index
    %c0_2 = arith.constant 0 : index
    %1 = vector.load %arg4[%c0_1, %c0_2] : memref<768x32xf32, #tpu.memory_space<vmem>>, vector<768x32xf32>
    %c0_3 = arith.constant 0 : index
    %c0_4 = arith.constant 0 : index
    %2 = vector.load %arg5[%c0_3, %c0_4] : memref<1x32xf32, #tpu.memory_space<vmem>>, vector<1x32xf32>
    %c0_5 = arith.constant 0 : index
    %c0_6 = arith.constant 0 : index
    %3 = vector.load %arg6[%c0_5, %c0_6] : memref<32x32xf32, #tpu.memory_space<vmem>>, vector<32x32xf32>
    %c0_7 = arith.constant 0 : index
    %c0_8 = arith.constant 0 : index
    %4 = vector.load %arg7[%c0_7, %c0_8] : memref<1x32xf32, #tpu.memory_space<vmem>>, vector<1x32xf32>
    %c0_9 = arith.constant 0 : index
    %c0_10 = arith.constant 0 : index
    %5 = vector.load %arg2[%c0_9, %c0_10] : memref<8x768xf32, #tpu.memory_space<vmem>>, vector<8x768xf32>
    %cst = arith.constant dense<0.000000e+00> : vector<8x32xf32>
    %6 = tpu.matmul %5, %1, %cst {dimension_numbers = #tpu.dot_dimension_numbers<[1], [0], [0], [1], [0, 0, 1, 1], [], []>} : vector<8x768xf32>, vector<768x32xf32>, vector<8x32xf32> -> vector<8x32xf32>
    %cst_11 = arith.constant dense<0.000000e+00> : vector<8x32xf32>
    %7 = tpu.matmul %0, %6, %cst_11 {dimension_numbers = #tpu.dot_dimension_numbers<[1], [0], [0], [1], [0, 0, 1, 1], [], []>} : vector<8x8xf32>, vector<8x32xf32>, vector<8x32xf32> -> vector<8x32xf32>
    %8 = vector.broadcast %2 : vector<1x32xf32> to vector<8x32xf32>
    %9 = arith.addf %7, %8 : vector<8x32xf32>
    %cst_12 = arith.constant 0.000000e+00 : f32
    %10 = vector.broadcast %cst_12 : f32 to vector<8x32xf32>
    %11 = arith.maximumf %9, %10 : vector<8x32xf32>
    %cst_13 = arith.constant dense<0.000000e+00> : vector<8x32xf32>
    %12 = tpu.matmul %11, %3, %cst_13 {dimension_numbers = #tpu.dot_dimension_numbers<[1], [0], [0], [1], [0, 0, 1, 1], [], []>} : vector<8x32xf32>, vector<32x32xf32>, vector<8x32xf32> -> vector<8x32xf32>
    %cst_14 = arith.constant dense<0.000000e+00> : vector<8x32xf32>
    %13 = tpu.matmul %0, %12, %cst_14 {dimension_numbers = #tpu.dot_dimension_numbers<[1], [0], [0], [1], [0, 0, 1, 1], [], []>} : vector<8x8xf32>, vector<8x32xf32>, vector<8x32xf32> -> vector<8x32xf32>
    %14 = vector.broadcast %4 : vector<1x32xf32> to vector<8x32xf32>
    %15 = arith.addf %13, %14 : vector<8x32xf32>
    %c0_15 = arith.constant 0 : index
    %c0_16 = arith.constant 0 : index
    %16 = vector.load %arg3[%c0_15, %c0_16] : memref<8x768xf32, #tpu.memory_space<vmem>>, vector<8x768xf32>
    %cst_17 = arith.constant dense<0.000000e+00> : vector<8x32xf32>
    %17 = tpu.matmul %16, %1, %cst_17 {dimension_numbers = #tpu.dot_dimension_numbers<[1], [0], [0], [1], [0, 0, 1, 1], [], []>} : vector<8x768xf32>, vector<768x32xf32>, vector<8x32xf32> -> vector<8x32xf32>
    %cst_18 = arith.constant dense<0.000000e+00> : vector<8x32xf32>
    %18 = tpu.matmul %0, %17, %cst_18 {dimension_numbers = #tpu.dot_dimension_numbers<[1], [0], [0], [1], [0, 0, 1, 1], [], []>} : vector<8x8xf32>, vector<8x32xf32>, vector<8x32xf32> -> vector<8x32xf32>
    %19 = vector.broadcast %2 : vector<1x32xf32> to vector<8x32xf32>
    %20 = arith.addf %18, %19 : vector<8x32xf32>
    %cst_19 = arith.constant 0.000000e+00 : f32
    %21 = vector.broadcast %cst_19 : f32 to vector<8x32xf32>
    %22 = arith.maximumf %20, %21 : vector<8x32xf32>
    %cst_20 = arith.constant dense<0.000000e+00> : vector<8x32xf32>
    %23 = tpu.matmul %22, %3, %cst_20 {dimension_numbers = #tpu.dot_dimension_numbers<[1], [0], [0], [1], [0, 0, 1, 1], [], []>} : vector<8x32xf32>, vector<32x32xf32>, vector<8x32xf32> -> vector<8x32xf32>
    %cst_21 = arith.constant dense<0.000000e+00> : vector<8x32xf32>
    %24 = tpu.matmul %0, %23, %cst_21 {dimension_numbers = #tpu.dot_dimension_numbers<[1], [0], [0], [1], [0, 0, 1, 1], [], []>} : vector<8x8xf32>, vector<8x32xf32>, vector<8x32xf32> -> vector<8x32xf32>
    %25 = vector.broadcast %4 : vector<1x32xf32> to vector<8x32xf32>
    %26 = arith.addf %24, %25 : vector<8x32xf32>
    %cst_22 = arith.constant dense<0.000000e+00> : vector<32xf32>
    %27 = vector.multi_reduction <add>, %15, %cst_22 [0] : vector<8x32xf32> to vector<32xf32>
    %28 = vector.shape_cast %27 : vector<32xf32> to vector<1x32xf32>
    %cst_23 = arith.constant 8.000000e+00 : f32
    %29 = vector.broadcast %cst_23 : f32 to vector<1x32xf32>
    %30 = arith.divf %28, %29 : vector<1x32xf32>
    %31 = arith.negf %30 : vector<1x32xf32>
    %32 = math.exp %31 : vector<1x32xf32>
    %cst_24 = arith.constant 1.000000e+00 : f32
    %33 = vector.broadcast %cst_24 : f32 to vector<1x32xf32>
    %34 = arith.addf %33, %32 : vector<1x32xf32>
    %35 = arith.divf %33, %34 : vector<1x32xf32>
    %c0_25 = arith.constant 0 : index
    %c0_26 = arith.constant 0 : index
    %36 = vector.load %arg8[%c0_25, %c0_26] : memref<32x32xf32, #tpu.memory_space<vmem>>, vector<32x32xf32>
    %37 = tpu.transpose %36, [1, 0] : vector<32x32xf32> -> vector<32x32xf32>
    %cst_27 = arith.constant dense<0.000000e+00> : vector<1x32xf32>
    %38 = tpu.matmul %35, %37, %cst_27 {dimension_numbers = #tpu.dot_dimension_numbers<[1], [0], [0], [1], [0, 0, 1, 1], [], []>} : vector<1x32xf32>, vector<32x32xf32>, vector<1x32xf32> -> vector<1x32xf32>
    %39 = vector.broadcast %38 : vector<1x32xf32> to vector<8x32xf32>
    %40 = arith.mulf %15, %39 : vector<8x32xf32>
    %cst_28 = arith.constant dense<0.000000e+00> : vector<8xf32>
    %41 = vector.multi_reduction <add>, %40, %cst_28 [1] : vector<8x32xf32> to vector<8xf32>
    %42 = vector.shape_cast %41 : vector<8xf32> to vector<8x1xf32>
    %43 = vector.broadcast %38 : vector<1x32xf32> to vector<8x32xf32>
    %44 = arith.mulf %26, %43 : vector<8x32xf32>
    %cst_29 = arith.constant dense<0.000000e+00> : vector<8xf32>
    %45 = vector.multi_reduction <add>, %44, %cst_29 [1] : vector<8x32xf32> to vector<8xf32>
    %46 = vector.shape_cast %45 : vector<8xf32> to vector<8x1xf32>
    %cst_30 = arith.constant 0.000000e+00 : f32
    %47 = vector.broadcast %cst_30 : f32 to vector<8x1xf32>
    %48 = arith.subf %47, %42 : vector<8x1xf32>
    %cst_31 = arith.constant 0.000000e+00 : f32
    %49 = vector.broadcast %cst_31 : f32 to vector<8x1xf32>
    %50 = arith.maximumf %48, %49 : vector<8x1xf32>
    %51 = math.absf %48 : vector<8x1xf32>
    %cst_32 = arith.constant 0.000000e+00 : f32
    %52 = vector.broadcast %cst_32 : f32 to vector<8x1xf32>
    %53 = arith.subf %52, %51 : vector<8x1xf32>
    %54 = math.exp %53 : vector<8x1xf32>
    %55 = math.log1p %54 : vector<8x1xf32>
    %56 = arith.addf %50, %55 : vector<8x1xf32>
    %57 = vector.shape_cast %56 : vector<8x1xf32> to vector<1x8x1xf32>
    %cst_33 = arith.constant dense<0.000000e+00> : vector<1xf32>
    %58 = vector.multi_reduction <add>, %57, %cst_33 [1, 2] : vector<1x8x1xf32> to vector<1xf32>
    %59 = vector.shape_cast %58 : vector<1xf32> to vector<1x1x1xf32>
    %60 = vector.extract %59[0, 0, 0] : f32 from vector<1x1x1xf32>
    %61 = vector.broadcast %60 : f32 to vector<1x1xf32>
    %cst_34 = arith.constant 8.000000e+00 : f32
    %62 = vector.broadcast %cst_34 : f32 to vector<1x1xf32>
    %63 = arith.divf %61, %62 : vector<1x1xf32>
    %cst_35 = arith.constant 0.000000e+00 : f32
    %64 = vector.broadcast %cst_35 : f32 to vector<8x1xf32>
    %65 = arith.maximumf %46, %64 : vector<8x1xf32>
    %66 = math.absf %46 : vector<8x1xf32>
    %cst_36 = arith.constant 0.000000e+00 : f32
    %67 = vector.broadcast %cst_36 : f32 to vector<8x1xf32>
    %68 = arith.subf %67, %66 : vector<8x1xf32>
    %69 = math.exp %68 : vector<8x1xf32>
    %70 = math.log1p %69 : vector<8x1xf32>
    %71 = arith.addf %65, %70 : vector<8x1xf32>
    %72 = vector.shape_cast %71 : vector<8x1xf32> to vector<1x8x1xf32>
    %cst_37 = arith.constant dense<0.000000e+00> : vector<1xf32>
    %73 = vector.multi_reduction <add>, %72, %cst_37 [1, 2] : vector<1x8x1xf32> to vector<1xf32>
    %74 = vector.shape_cast %73 : vector<1xf32> to vector<1x1x1xf32>
    %75 = vector.extract %74[0, 0, 0] : f32 from vector<1x1x1xf32>
    %76 = vector.broadcast %75 : f32 to vector<1x1xf32>
    %cst_38 = arith.constant 8.000000e+00 : f32
    %77 = vector.broadcast %cst_38 : f32 to vector<1x1xf32>
    %78 = arith.divf %76, %77 : vector<1x1xf32>
    %79 = arith.addf %63, %78 : vector<1x1xf32>
    %80 = vector.shape_cast %79 : vector<1x1xf32> to vector<1x1xf32>
    %81 = vector.broadcast %80 : vector<1x1xf32> to vector<1x128xf32>
    %c0_39 = arith.constant 0 : index
    %c0_40 = arith.constant 0 : index
    %82 = vector.load %arg9[%c0_39, %c0_40] : memref<1x128xf32, #tpu.memory_space<vmem>>, vector<1x128xf32>
    tpu.vector_store %arg9[%c0_39, %c0_40], %81 {strides = array<i32>} : memref<1x128xf32, #tpu.memory_space<vmem>>, vector<1x128xf32>,
    return
  }
  func.func @transform_0(%arg0: i32) -> (i32, i32) {
    %c0_i32 = arith.constant 0 : i32
    %c0_i32_0 = arith.constant 0 : i32
    %c0_i32_1 = arith.constant 0 : i32
    return %c0_i32, %c0_i32_0 : i32, i32
  }
  func.func @transform_1(%arg0: i32) -> (i32, i32) {
    %c0_i32 = arith.constant 0 : i32
    %c0_i32_0 = arith.constant 0 : i32
    %c0_i32_1 = arith.constant 0 : i32
    return %c0_i32, %c0_i32_0 : i32, i32
  }
  func.func @transform_2(%arg0: i32) -> (i32, i32) {
    %c0_i32 = arith.constant 0 : i32
    %c0_i32_0 = arith.constant 0 : i32
    %c0_i32_1 = arith.constant 0 : i32
    return %c0_i32, %c0_i32_0 : i32, i32
  }
  func.func @transform_3(%arg0: i32) -> (i32, i32) {
    %c0_i32 = arith.constant 0 : i32
    %c0_i32_0 = arith.constant 0 : i32
    %c0_i32_1 = arith.constant 0 : i32
    return %c0_i32, %c0_i32_0 : i32, i32
  }
  func.func @transform_4(%arg0: i32) -> (i32, i32) {
    %c0_i32 = arith.constant 0 : i32
    %c0_i32_0 = arith.constant 0 : i32
    %c0_i32_1 = arith.constant 0 : i32
    return %c0_i32, %c0_i32_0 : i32, i32
  }
  func.func @transform_5(%arg0: i32) -> (i32, i32) {
    %c0_i32 = arith.constant 0 : i32
    %c0_i32_0 = arith.constant 0 : i32
    %c0_i32_1 = arith.constant 0 : i32
    return %c0_i32, %c0_i32_0 : i32, i32
  }
  func.func @transform_6(%arg0: i32) -> (i32, i32) {
    %c0_i32 = arith.constant 0 : i32
    %c0_i32_0 = arith.constant 0 : i32
    %c0_i32_1 = arith.constant 0 : i32
    return %c0_i32, %c0_i32_0 : i32, i32
  }
  func.func @transform_7(%arg0: i32) -> (i32, i32) {
    %c0_i32 = arith.constant 0 : i32
    %c0_i32_0 = arith.constant 0 : i32
    %c0_i32_1 = arith.constant 0 : i32
    return %c0_i32, %c0_i32_0 : i32, i32
  }
  func.func @transform_8(%arg0: i32) -> (i32, i32) {
    %c0_i32 = arith.constant 0 : i32
    %c0_i32_0 = arith.constant 0 : i32
    %c0_i32_1 = arith.constant 0 : i32
    return %c0_i32, %c0_i32_0 : i32, i32
  }
}

</mosaic_0001>

<llo_original>
// kernel: dgi_forward.3
$region0: #{dgi_forward.3}
  #allocation0 [shape = 'u32[]', space=smem, size = 0x4, offset = 0x4, fixed_abs, tag = 'smem constant byte address 0x4 - core index']
  #allocation1 [shape = 'u32[144,128]{1,0:T(1,128)}', space=vmem, size = 0x12000, scoped, tag = 'internal scratch']
  %s0 = inlined_call_operand.vmem [shape: f32[8,8], index: 0, kind: input, shape index: {}]
  %s1 = inlined_call_operand.vmem [shape: f32[8,768], index: 1, kind: input, shape index: {}]
  %s2 = inlined_call_operand.vmem [shape: f32[8,768], index: 2, kind: input, shape index: {}]
  %s3 = inlined_call_operand.vmem [shape: f32[768,32], index: 3, kind: input, shape index: {}]
  %s4 = inlined_call_operand.vmem [shape: f32[1,32], index: 4, kind: input, shape index: {}]
  %s5 = inlined_call_operand.vmem [shape: f32[32,32], index: 5, kind: input, shape index: {}]
  %s6 = inlined_call_operand.vmem [shape: f32[1,32], index: 6, kind: input, shape index: {}]
  %s7 = inlined_call_operand.vmem [shape: f32[32,32], index: 7, kind: input, shape index: {}]
  %s8 = inlined_call_operand.hbm [shape: f32[1,128], index: 8, kind: output, shape index: {}]
  %s9 = sld [smem:[#allocation0]]
  $region42: #{dgi_forward.3} parent=0
    _
  %s11 = ssub.s32 1, %s9
  %s12 = scalar_select 0, %s11, %s9
  $region1: #{dgi_forward.3} parent=0
    #allocation2 [shape = 'u8[512]{0}', space=vmem, size = 0x400, scoped, tag = 'output window, operand 0, single buffered']
    #allocation3 [shape = 's32[1]{0}', space=sflag, size = 0x4, scoped, tag = 'scoped memory for dgi_forward.3']
    %13 = vsyncpa [#allocation3], 0
    // Predicated region
    $region2: #{dgi_forward.3} parent=1 // pred_check
      _
    $region3: #{dgi_forward.3} parent=1 // pred_check_branch
      %15 = sbr.rel (0) target = $region5
    $region4: #{dgi_forward.3} parent=1 // pred_region
      _
    $region5: #{dgi_forward.3} parent=1 // pred_fallthru
      _
    // Predicated region
    $region6: #{dgi_forward.3} parent=1 // pred_check
      _
    $region7: #{dgi_forward.3} parent=1 // pred_check_branch
      %17 = sbr.rel (0) target = $region9
    $region8: #{dgi_forward.3} parent=1 // pred_region
      _
    $region9: #{dgi_forward.3} parent=1 // pred_fallthru
      _
    // Predicated region
    $region10: #{dgi_forward.3} parent=1 // pred_check
      _
    $region11: #{dgi_forward.3} parent=1 // pred_check_branch
      %19 = sbr.rel (0) target = $region13
    $region12: #{dgi_forward.3} parent=1 // pred_region
      _
    $region13: #{dgi_forward.3} parent=1 // pred_fallthru
      _
    // Predicated region
    $region14: #{dgi_forward.3} parent=1 // pred_check
      _
    $region15: #{dgi_forward.3} parent=1 // pred_check_branch
      %21 = sbr.rel (0) target = $region17
    $region16: #{dgi_forward.3} parent=1 // pred_region
      _
    $region17: #{dgi_forward.3} parent=1 // pred_fallthru
      _
    // Predicated region
    $region18: #{dgi_forward.3} parent=1 // pred_check
      _
    $region19: #{dgi_forward.3} parent=1 // pred_check_branch
      %23 = sbr.rel (0) target = $region21
    $region20: #{dgi_forward.3} parent=1 // pred_region
      _
    $region21: #{dgi_forward.3} parent=1 // pred_fallthru
      _
    // Predicated region
    $region22: #{dgi_forward.3} parent=1 // pred_check
      _
    $region23: #{dgi_forward.3} parent=1 // pred_check_branch
      %25 = sbr.rel (0) target = $region25
    $region24: #{dgi_forward.3} parent=1 // pred_region
      _
    $region25: #{dgi_forward.3} parent=1 // pred_fallthru
      _
    // Predicated region
    $region26: #{dgi_forward.3} parent=1 // pred_check
      _
    $region27: #{dgi_forward.3} parent=1 // pred_check_branch
      %27 = sbr.rel (0) target = $region29
    $region28: #{dgi_forward.3} parent=1 // pred_region
      _
    $region29: #{dgi_forward.3} parent=1 // pred_fallthru
      _
    // Predicated region
    $region30: #{dgi_forward.3} parent=1 // pred_check
      _
    $region31: #{dgi_forward.3} parent=1 // pred_check_branch
      %29 = sbr.rel (0) target = $region33
    $region32: #{dgi_forward.3} parent=1 // pred_region
      _
    $region33: #{dgi_forward.3} parent=1 // pred_fallthru
      _
    %v30 = vld [vmem:[%s0] sm:$0xff]
    %v31 = vld [vmem:[%s3] sm:$0xff]
    %v32 = vld [vmem:[%s3 + $0x8] sm:$0xff]
    %v33 = vld [vmem:[%s3 + $0x10] sm:$0xff]
    %v34 = vld [vmem:[%s3 + $0x18] sm:$0xff]
    %v35 = vld [vmem:[%s3 + $0x20] sm:$0xff]
    %v36 = vld [vmem:[%s3 + $0x28] sm:$0xff]
    %v37 = vld [vmem:[%s3 + $0x30] sm:$0xff]
    %v38 = vld [vmem:[%s3 + $0x38] sm:$0xff]
    %v39 = vld [vmem:[%s3 + $0x40] sm:$0xff]
    %v40 = vld [vmem:[%s3 + $0x48] sm:$0xff]
    %v41 = vld [vmem:[%s3 + $0x50] sm:$0xff]
    %v42 = vld [vmem:[%s3 + $0x58] sm:$0xff]
    %v43 = vld [vmem:[%s3 + $0x60] sm:$0xff]
    %v44 = vld [vmem:[%s3 + $0x68] sm:$0xff]
    %v45 = vld [vmem:[%s3 + $0x70] sm:$0xff]
    %v46 = vld [vmem:[%s3 + $0x78] sm:$0xff]
    %v47 = vld [vmem:[%s3 + $0x80] sm:$0xff]
    %v48 = vld [vmem:[%s3 + $0x88] sm:$0xff]
    %v49 = vld [vmem:[%s3 + $0x90] sm:$0xff]
    %v50 = vld [vmem:[%s3 + $0x98] sm:$0xff]
    %v51 = vld [vmem:[%s3 + $0xa0] sm:$0xff]
    %v52 = vld [vmem:[%s3 + $0xa8] sm:$0xff]
    %v53 = vld [vmem:[%s3 + $0xb0] sm:$0xff]
    %v54 = vld [vmem:[%s3 + $0xb8] sm:$0xff]
    %v55 = vld [vmem:[%s3 + $0xc0] sm:$0xff]
    %v56 = vld [vmem:[%s3 + $0xc8] sm:$0xff]
    %v57 = vld [vmem:[%s3 + $0xd0] sm:$0xff]
    %v58 = vld [vmem:[%s3 + $0xd8] sm:$0xff]
    %v59 = vld [vmem:[%s3 + $0xe0] sm:$0xff]
    %v60 = vld [vmem:[%s3 + $0xe8] sm:$0xff]
    %v61 = vld [vmem:[%s3 + $0xf0] sm:$0xff]
    %v62 = vld [vmem:[%s3 + $0xf8] sm:$0xff]
    %v63 = vld [vmem:[%s3 + $0x100] sm:$0xff]
    %v64 = vld [vmem:[%s3 + $0x108] sm:$0xff]
    %v65 = vld [vmem:[%s3 + $0x110] sm:$0xff]
    %v66 = vld [vmem:[%s3 + $0x118] sm:$0xff]
    %v67 = vld [vmem:[%s3 + $0x120] sm:$0xff]
    %v68 = vld [vmem:[%s3 + $0x128] sm:$0xff]
    %v69 = vld [vmem:[%s3 + $0x130] sm:$0xff]
    %v70 = vld [vmem:[%s3 + $0x138] sm:$0xff]
    %v71 = vld [vmem:[%s3 + $0x140] sm:$0xff]
    %v72 = vld [vmem:[%s3 + $0x148] sm:$0xff]
    %v73 = vld [vmem:[%s3 + $0x150] sm:$0xff]
    %v74 = vld [vmem:[%s3 + $0x158] sm:$0xff]
    %v75 = vld [vmem:[%s3 + $0x160] sm:$0xff]
    %v76 = vld [vmem:[%s3 + $0x168] sm:$0xff]
    %v77 = vld [vmem:[%s3 + $0x170] sm:$0xff]
    %v78 = vld [vmem:[%s3 + $0x178] sm:$0xff]
    %v79 = vld [vmem:[%s3 + $0x180] sm:$0xff]
    %v80 = vld [vmem:[%s3 + $0x188] sm:$0xff]
    %v81 = vld [vmem:[%s3 + $0x190] sm:$0xff]
    %v82 = vld [vmem:[%s3 + $0x198] sm:$0xff]
    %v83 = vld [vmem:[%s3 + $0x1a0] sm:$0xff]
    %v84 = vld [vmem:[%s3 + $0x1a8] sm:$0xff]
    %v85 = vld [vmem:[%s3 + $0x1b0] sm:$0xff]
    %v86 = vld [vmem:[%s3 + $0x1b8] sm:$0xff]
    %v87 = vld [vmem:[%s3 + $0x1c0] sm:$0xff]
    %v88 = vld [vmem:[%s3 + $0x1c8] sm:$0xff]
    %v89 = vld [vmem:[%s3 + $0x1d0] sm:$0xff]
    %v90 = vld [vmem:[%s3 + $0x1d8] sm:$0xff]
    %v91 = vld [vmem:[%s3 + $0x1e0] sm:$0xff]
    %v92 = vld [vmem:[%s3 + $0x1e8] sm:$0xff]
    %v93 = vld [vmem:[%s3 + $0x1f0] sm:$0xff]
    %v94 = vld [vmem:[%s3 + $0x1f8] sm:$0xff]
    %v95 = vld [vmem:[%s3 + $0x200] sm:$0xff]
    %v96 = vld [vmem:[%s3 + $0x208] sm:$0xff]
    %v97 = vld [vmem:[%s3 + $0x210] sm:$0xff]
    %v98 = vld [vmem:[%s3 + $0x218] sm:$0xff]
    %v99 = vld [vmem:[%s3 + $0x220] sm:$0xff]
    %v100 = vld [vmem:[%s3 + $0x228] sm:$0xff]
    %v101 = vld [vmem:[%s3 + $0x230] sm:$0xff]
    %v102 = vld [vmem:[%s3 + $0x238] sm:$0xff]
    %v103 = vld [vmem:[%s3 + $0x240] sm:$0xff]
    %v104 = vld [vmem:[%s3 + $0x248] sm:$0xff]
    %v105 = vld [vmem:[%s3 + $0x250] sm:$0xff]
    %v106 = vld [vmem:[%s3 + $0x258] sm:$0xff]
    %v107 = vld [vmem:[%s3 + $0x260] sm:$0xff]
    %v108 = vld [vmem:[%s3 + $0x268] sm:$0xff]
    %v109 = vld [vmem:[%s3 + $0x270] sm:$0xff]
    %v110 = vld [vmem:[%s3 + $0x278] sm:$0xff]
    %v111 = vld [vmem:[%s3 + $0x280] sm:$0xff]
    %v112 = vld [vmem:[%s3 + $0x288] sm:$0xff]
    %v113 = vld [vmem:[%s3 + $0x290] sm:$0xff]
    %v114 = vld [vmem:[%s3 + $0x298] sm:$0xff]
    %v115 = vld [vmem:[%s3 + $0x2a0] sm:$0xff]
    %v116 = vld [vmem:[%s3 + $0x2a8] sm:$0xff]
    %v117 = vld [vmem:[%s3 + $0x2b0] sm:$0xff]
    %v118 = vld [vmem:[%s3 + $0x2b8] sm:$0xff]
    %v119 = vld [vmem:[%s3 + $0x2c0] sm:$0xff]
    %v120 = vld [vmem:[%s3 + $0x2c8] sm:$0xff]
    %v121 = vld [vmem:[%s3 + $0x2d0] sm:$0xff]
    %v122 = vld [vmem:[%s3 + $0x2d8] sm:$0xff]
    %v123 = vld [vmem:[%s3 + $0x2e0] sm:$0xff]
    %v124 = vld [vmem:[%s3 + $0x2e8] sm:$0xff]
    %v125 = vld [vmem:[%s3 + $0x2f0] sm:$0xff]
    %v126 = vld [vmem:[%s3 + $0x2f8] sm:$0xff]
    %v127 = vld [vmem:[%s4] sm:$0x1]
    %v128 = vld [vmem:[%s5] sm:$0xff]
    %v129 = vld [vmem:[%s5 + $0x8] sm:$0xff]
    %v130 = vld [vmem:[%s5 + $0x10] sm:$0xff]
    %v131 = vld [vmem:[%s5 + $0x18] sm:$0xff]
    %v132 = vld [vmem:[%s6] sm:$0x1]
    %v133 = vld [vmem:[%s1] sm:$0xff]
    %v134 = vld [vmem:[%s1 + $0x8] sm:$0xff]
    %v135 = vld [vmem:[%s1 + $0x10] sm:$0xff]
    %v136 = vld [vmem:[%s1 + $0x18] sm:$0xff]
    %v137 = vld [vmem:[%s1 + $0x20] sm:$0xff]
    %v138 = vld [vmem:[%s1 + $0x28] sm:$0xff]
    %139 = vmatprep.subr.mxu0 0.0
    %140 = vmatpush1.msra.mxu0 %v31
    %141 = vmatprep.subr.mxu0 0.0
    %142 = vmatpush1.msra.mxu0 %v32
    %143 = vmatprep.subr.mxu0 0.0
    %144 = vmatpush1.msra.mxu0 %v33
    %145 = vmatprep.subr.mxu0 0.0
    %146 = vmatpush1.msra.mxu0 %v34
    %147 = vmatprep.subr.mxu0 0.0
    %148 = vmatpush1.msra.mxu0 %v35
    %149 = vmatprep.subr.mxu0 0.0
    %150 = vmatpush1.msra.mxu0 %v36
    %151 = vmatprep.subr.mxu0 0.0
    %152 = vmatpush1.msra.mxu0 %v37
    %153 = vmatprep.subr.mxu0 0.0
    %154 = vmatpush1.msra.mxu0 %v38
    %155 = vmatprep.subr.mxu0 0.0
    %156 = vmatpush1.msra.mxu0 %v39
    %157 = vmatprep.subr.mxu0 0.0
    %158 = vmatpush1.msra.mxu0 %v40
    %159 = vmatprep.subr.mxu0 0.0
    %160 = vmatpush1.msra.mxu0 %v41
    %161 = vmatprep.subr.mxu0 0.0
    %162 = vmatpush1.msra.mxu0 %v42
    %163 = vmatprep.subr.mxu0 0.0
    %164 = vmatpush1.msra.mxu0 %v43
    %165 = vmatprep.subr.mxu0 0.0
    %166 = vmatpush1.msra.mxu0 %v44
    %167 = vmatprep.subr.mxu0 0.0
    %168 = vmatpush1.msra.mxu0 %v45
    %169 = vmatprep.subr.mxu0 0.0
    %170 = vmatpush1.msra.mxu0 %v46
    %171 = vmatprep.subr.mxu0 0.0
    %172 = vmatpush1.msra.mxu0 %v47
    %173 = vmatprep.subr.mxu0 0.0
    %174 = vmatpush1.msra.mxu0 %v48
    %175 = vmatprep.subr.mxu0 0.0
    %176 = vmatpush1.msra.mxu0 %v49
    %177 = vmatprep.subr.mxu0 0.0
    %178 = vmatpush1.msra.mxu0 %v50
    %179 = vmatprep.subr.mxu0 0.0
    %180 = vmatpush1.msra.mxu0 %v51
    %181 = vmatprep.subr.mxu0 0.0
    %182 = vmatpush1.msra.mxu0 %v52
    %183 = vmatprep.subr.mxu0 0.0
    %184 = vmatpush1.msra.mxu0 %v53
    %185 = vmatprep.subr.mxu0 0.0
    %186 = vmatpush1.msra.mxu0 %v54
    %187 = vmatprep.subr.mxu0 0.0
    %188 = vmatpush1.msra.mxu0 %v55
    %189 = vmatprep.subr.mxu0 0.0
    %190 = vmatpush1.msra.mxu0 %v56
    %191 = vmatprep.subr.mxu0 0.0
    %192 = vmatpush1.msra.mxu0 %v57
    %193 = vmatprep.subr.mxu0 0.0
    %194 = vmatpush1.msra.mxu0 %v58
    %195 = vmatprep.subr.mxu0 0.0
    %196 = vmatpush1.msra.mxu0 %v59
    %197 = vmatprep.subr.mxu0 0.0
    %198 = vmatpush1.msra.mxu0 %v60
    %199 = vmatprep.subr.mxu0 0.0
    %200 = vmatpush1.msra.mxu0 %v61
    %201 = vmatprep.subr.mxu0 0.0
    %202 = vmatpush1.msra.mxu0 %v62
    %203 = vmatprep.mubr.f32.mxu0 %v134
    %204 = vmatmul.mubr.f32.gmra.mrb[0].mxu0 %v133
    %v205 = vpop.f32.mrb[0].mxu0
    %v206 = vadd.f32 0.0, %v205
    %v207 = vpop.f32.mrb[0].mxu0
    %208 = vdwg.mxu0
    %209 = vmatprep.subr.mxu0 0.0
    %210 = vmatpush1.msra.mxu0 %v63
    %211 = vmatprep.subr.mxu0 0.0
    %212 = vmatpush1.msra.mxu0 %v64
    %213 = vmatprep.subr.mxu0 0.0
    %214 = vmatpush1.msra.mxu0 %v65
    %215 = vmatprep.subr.mxu0 0.0
    %216 = vmatpush1.msra.mxu0 %v66
    %217 = vmatprep.subr.mxu0 0.0
    %218 = vmatpush1.msra.mxu0 %v67
    %219 = vmatprep.subr.mxu0 0.0
    %220 = vmatpush1.msra.mxu0 %v68
    %221 = vmatprep.subr.mxu0 0.0
    %222 = vmatpush1.msra.mxu0 %v69
    %223 = vmatprep.subr.mxu0 0.0
    %224 = vmatpush1.msra.mxu0 %v70
    %225 = vmatprep.subr.mxu0 0.0
    %226 = vmatpush1.msra.mxu0 %v71
    %227 = vmatprep.subr.mxu0 0.0
    %228 = vmatpush1.msra.mxu0 %v72
    %229 = vmatprep.subr.mxu0 0.0
    %230 = vmatpush1.msra.mxu0 %v73
    %231 = vmatprep.subr.mxu0 0.0
    %232 = vmatpush1.msra.mxu0 %v74
    %233 = vmatprep.subr.mxu0 0.0
    %234 = vmatpush1.msra.mxu0 %v75
    %235 = vmatprep.subr.mxu0 0.0
    %236 = vmatpush1.msra.mxu0 %v76
    %237 = vmatprep.subr.mxu0 0.0
    %238 = vmatpush1.msra.mxu0 %v77
    %239 = vmatprep.subr.mxu0 0.0
    %240 = vmatpush1.msra.mxu0 %v78
    %241 = vmatprep.subr.mxu0 0.0
    %242 = vmatpush1.msra.mxu0 %v79
    %243 = vmatprep.subr.mxu0 0.0
    %244 = vmatpush1.msra.mxu0 %v80
    %245 = vmatprep.subr.mxu0 0.0
    %246 = vmatpush1.msra.mxu0 %v81
    %247 = vmatprep.subr.mxu0 0.0
    %248 = vmatpush1.msra.mxu0 %v82
    %249 = vmatprep.subr.mxu0 0.0
    %250 = vmatpush1.msra.mxu0 %v83
    %251 = vmatprep.subr.mxu0 0.0
    %252 = vmatpush1.msra.mxu0 %v84
    %253 = vmatprep.subr.mxu0 0.0
    %254 = vmatpush1.msra.mxu0 %v85
    %255 = vmatprep.subr.mxu0 0.0
    %256 = vmatpush1.msra.mxu0 %v86
    %257 = vmatprep.subr.mxu0 0.0
    %258 = vmatpush1.msra.mxu0 %v87
    %259 = vmatprep.subr.mxu0 0.0
    %260 = vmatpush1.msra.mxu0 %v88
    %261 = vmatprep.subr.mxu0 0.0
    %262 = vmatpush1.msra.mxu0 %v89
    %263 = vmatprep.subr.mxu0 0.0
    %264 = vmatpush1.msra.mxu0 %v90
    %265 = vmatprep.subr.mxu0 0.0
    %266 = vmatpush1.msra.mxu0 %v91
    %267 = vmatprep.subr.mxu0 0.0
    %268 = vmatpush1.msra.mxu0 %v92
    %269 = vmatprep.subr.mxu0 0.0
    %270 = vmatpush1.msra.mxu0 %v93
    %271 = vmatprep.subr.mxu0 0.0
    %272 = vmatpush1.msra.mxu0 %v94
    %273 = vmatprep.mubr.f32.mxu0 %v136
    %274 = vmatmul.mubr.f32.gmra.mrb[0].mxu0 %v135
    %v275 = vpop.f32.mrb[0].mxu0
    %v276 = vadd.f32 %v206, %v275
    %v277 = vpop.f32.mrb[0].mxu0
    %278 = vdwg.mxu0
    %279 = vmatprep.subr.mxu0 0.0
    %280 = vmatpush1.msra.mxu0 %v95
    %281 = vmatprep.subr.mxu0 0.0
    %282 = vmatpush1.msra.mxu0 %v96
    %283 = vmatprep.subr.mxu0 0.0
    %284 = vmatpush1.msra.mxu0 %v97
    %285 = vmatprep.subr.mxu0 0.0
    %286 = vmatpush1.msra.mxu0 %v98
    %287 = vmatprep.subr.mxu0 0.0
    %288 = vmatpush1.msra.mxu0 %v99
    %289 = vmatprep.subr.mxu0 0.0
    %290 = vmatpush1.msra.mxu0 %v100
    %291 = vmatprep.subr.mxu0 0.0
    %292 = vmatpush1.msra.mxu0 %v101
    %293 = vmatprep.subr.mxu0 0.0
    %294 = vmatpush1.msra.mxu0 %v102
    %295 = vmatprep.subr.mxu0 0.0
    %296 = vmatpush1.msra.mxu0 %v103
    %297 = vmatprep.subr.mxu0 0.0
    %298 = vmatpush1.msra.mxu0 %v104
    %299 = vmatprep.subr.mxu0 0.0
    %300 = vmatpush1.msra.mxu0 %v105
    %301 = vmatprep.subr.mxu0 0.0
    %302 = vmatpush1.msra.mxu0 %v106
    %303 = vmatprep.subr.mxu0 0.0
    %304 = vmatpush1.msra.mxu0 %v107
    %305 = vmatprep.subr.mxu0 0.0
    %306 = vmatpush1.msra.mxu0 %v108
    %307 = vmatprep.subr.mxu0 0.0
    %308 = vmatpush1.msra.mxu0 %v109
    %309 = vmatprep.subr.mxu0 0.0
    %310 = vmatpush1.msra.mxu0 %v110
    %311 = vmatprep.subr.mxu0 0.0
    %312 = vmatpush1.msra.mxu0 %v111
    %313 = vmatprep.subr.mxu0 0.0
    %314 = vmatpush1.msra.mxu0 %v112
    %315 = vmatprep.subr.mxu0 0.0
    %316 = vmatpush1.msra.mxu0 %v113
    %317 = vmatprep.subr.mxu0 0.0
    %318 = vmatpush1.msra.mxu0 %v114
    %319 = vmatprep.subr.mxu0 0.0
    %320 = vmatpush1.msra.mxu0 %v115
    %321 = vmatprep.subr.mxu0 0.0
    %322 = vmatpush1.msra.mxu0 %v116
    %323 = vmatprep.subr.mxu0 0.0
    %324 = vmatpush1.msra.mxu0 %v117
    %325 = vmatprep.subr.mxu0 0.0
    %326 = vmatpush1.msra.mxu0 %v118
    %327 = vmatprep.subr.mxu0 0.0
    %328 = vmatpush1.msra.mxu0 %v119
    %329 = vmatprep.subr.mxu0 0.0
    %330 = vmatpush1.msra.mxu0 %v120
    %331 = vmatprep.subr.mxu0 0.0
    %332 = vmatpush1.msra.mxu0 %v121
    %333 = vmatprep.subr.mxu0 0.0
    %334 = vmatpush1.msra.mxu0 %v122
    %335 = vmatprep.subr.mxu0 0.0
    %336 = vmatpush1.msra.mxu0 %v123
    %337 = vmatprep.subr.mxu0 0.0
    %338 = vmatpush1.msra.mxu0 %v124
    %339 = vmatprep.subr.mxu0 0.0
    %340 = vmatpush1.msra.mxu0 %v125
    %341 = vmatprep.subr.mxu0 0.0
    %342 = vmatpush1.msra.mxu0 %v126
    %343 = vmatprep.mubr.f32.mxu0 %v138
    %344 = vmatmul.mubr.f32.gmra.mrb[0].mxu0 %v137
    %v345 = vpop.f32.mrb[0].mxu0
    %v346 = vadd.f32 %v276, %v345
    %v347 = vpop.f32.mrb[0].mxu0
    %348 = vdwg.mxu0
    %v350 = vlaneseq
    %v351 = vshrl.u32 %v350, 7
    %v352 = vsub.s32 0, %v351
    %v353 = vrot.slane %v127, %v352
    %vm355 = vcmask 64512
    %v357 = vsel %vm355, %v30, 0
    %359 = vmatprep.subr.mxu0 0.0
    %360 = vmatpush1.msra.mxu0 %v346
    %361 = vmatprep.subr.mxu0 0.0
    %362 = vmatpush1.msra.mxu0 0.0
    %363 = vmatprep.subr.mxu0 0.0
    %364 = vmatpush1.msra.mxu0 0.0
    %365 = vmatprep.subr.mxu0 0.0
    %366 = vmatpush1.msra.mxu0 0.0
    %367 = vmatprep.subr.mxu0 0.0
    %368 = vmatpush1.msra.mxu0 0.0
    %369 = vmatprep.subr.mxu0 0.0
    %370 = vmatpush1.msra.mxu0 0.0
    %371 = vmatprep.subr.mxu0 0.0
    %372 = vmatpush1.msra.mxu0 0.0
    %373 = vmatprep.subr.mxu0 0.0
    %374 = vmatpush1.msra.mxu0 0.0
    %375 = vmatprep.subr.mxu0 0.0
    %376 = vmatpush1.msra.mxu0 0.0
    %377 = vmatprep.subr.mxu0 0.0
    %378 = vmatpush1.msra.mxu0 0.0
    %379 = vmatprep.subr.mxu0 0.0
    %380 = vmatpush1.msra.mxu0 0.0
    %381 = vmatprep.subr.mxu0 0.0
    %382 = vmatpush1.msra.mxu0 0.0
    %383 = vmatprep.subr.mxu0 0.0
    %384 = vmatpush1.msra.mxu0 0.0
    %385 = vmatprep.subr.mxu0 0.0
    %386 = vmatpush1.msra.mxu0 0.0
    %387 = vmatprep.subr.mxu0 0.0
    %388 = vmatpush1.msra.mxu0 0.0
    %389 = vmatprep.subr.mxu0 0.0
    %390 = vmatpush1.msra.mxu0 0.0
    %391 = vmatprep.subr.mxu0 0.0
    %392 = vmatpush1.msra.mxu0 0.0
    %393 = vmatprep.subr.mxu0 0.0
    %394 = vmatpush1.msra.mxu0 0.0
    %395 = vmatprep.subr.mxu0 0.0
    %396 = vmatpush1.msra.mxu0 0.0
    %397 = vmatprep.subr.mxu0 0.0
    %398 = vmatpush1.msra.mxu0 0.0
    %399 = vmatprep.subr.mxu0 0.0
    %400 = vmatpush1.msra.mxu0 0.0
    %401 = vmatprep.subr.mxu0 0.0
    %402 = vmatpush1.msra.mxu0 0.0
    %403 = vmatprep.subr.mxu0 0.0
    %404 = vmatpush1.msra.mxu0 0.0
    %405 = vmatprep.subr.mxu0 0.0
    %406 = vmatpush1.msra.mxu0 0.0
    %407 = vmatprep.subr.mxu0 0.0
    %408 = vmatpush1.msra.mxu0 0.0
    %409 = vmatprep.subr.mxu0 0.0
    %410 = vmatpush1.msra.mxu0 0.0
    %411 = vmatprep.subr.mxu0 0.0
    %412 = vmatpush1.msra.mxu0 0.0
    %413 = vmatprep.subr.mxu0 0.0
    %414 = vmatpush1.msra.mxu0 0.0
    %415 = vmatprep.subr.mxu0 0.0
    %416 = vmatpush1.msra.mxu0 0.0
    %417 = vmatprep.subr.mxu0 0.0
    %418 = vmatpush1.msra.mxu0 0.0
    %419 = vmatprep.subr.mxu0 0.0
    %420 = vmatpush1.msra.mxu0 0.0
    %421 = vmatprep.subr.mxu0 0.0
    %422 = vmatpush1.msra.mxu0 0.0
    %423 = vmatprep.mubr.f32.mxu0 0.0
    %424 = vmatmul.mubr.f32.gmra.mrb[0].mxu0 %v357
    %v425 = vpop.f32.mrb[0].mxu0
    %v426 = vadd.f32 %v353, %v425
    %v427 = vpop.f32.mrb[0].mxu0
    %428 = vdwg.mxu0
    %v429 = vmax.f32 %v426, 0.0
    %vm430 = vcmask 261120
    %v432 = vsel %vm430, %v429, 0
    %434 = vmatprep.subr.mxu0 0.0
    %435 = vmatpush1.msra.mxu0 %v128
    %436 = vmatprep.subr.mxu0 0.0
    %437 = vmatpush1.msra.mxu0 %v129
    %438 = vmatprep.subr.mxu0 0.0
    %439 = vmatpush1.msra.mxu0 %v130
    %440 = vmatprep.subr.mxu0 0.0
    %441 = vmatpush1.msra.mxu0 %v131
    %442 = vmatprep.subr.mxu0 0.0
    %443 = vmatpush1.msra.mxu0 0.0
    %444 = vmatprep.subr.mxu0 0.0
    %445 = vmatpush1.msra.mxu0 0.0
    %446 = vmatprep.subr.mxu0 0.0
    %447 = vmatpush1.msra.mxu0 0.0
    %448 = vmatprep.subr.mxu0 0.0
    %449 = vmatpush1.msra.mxu0 0.0
    %450 = vmatprep.subr.mxu0 0.0
    %451 = vmatpush1.msra.mxu0 0.0
    %452 = vmatprep.subr.mxu0 0.0
    %453 = vmatpush1.msra.mxu0 0.0
    %454 = vmatprep.subr.mxu0 0.0
    %455 = vmatpush1.msra.mxu0 0.0
    %456 = vmatprep.subr.mxu0 0.0
    %457 = vmatpush1.msra.mxu0 0.0
    %458 = vmatprep.subr.mxu0 0.0
    %459 = vmatpush1.msra.mxu0 0.0
    %460 = vmatprep.subr.mxu0 0.0
    %461 = vmatpush1.msra.mxu0 0.0
    %462 = vmatprep.subr.mxu0 0.0
    %463 = vmatpush1.msra.mxu0 0.0
    %464 = vmatprep.subr.mxu0 0.0
    %465 = vmatpush1.msra.mxu0 0.0
    %466 = vmatprep.subr.mxu0 0.0
    %467 = vmatpush1.msra.mxu0 0.0
    %468 = vmatprep.subr.mxu0 0.0
    %469 = vmatpush1.msra.mxu0 0.0
    %470 = vmatprep.subr.mxu0 0.0
    %471 = vmatpush1.msra.mxu0 0.0
    %472 = vmatprep.subr.mxu0 0.0
    %473 = vmatpush1.msra.mxu0 0.0
    %474 = vmatprep.subr.mxu0 0.0
    %475 = vmatpush1.msra.mxu0 0.0
    %476 = vmatprep.subr.mxu0 0.0
    %477 = vmatpush1.msra.mxu0 0.0
    %478 = vmatprep.subr.mxu0 0.0
    %479 = vmatpush1.msra.mxu0 0.0
    %480 = vmatprep.subr.mxu0 0.0
    %481 = vmatpush1.msra.mxu0 0.0
    %482 = vmatprep.subr.mxu0 0.0
    %483 = vmatpush1.msra.mxu0 0.0
    %484 = vmatprep.subr.mxu0 0.0
    %485 = vmatpush1.msra.mxu0 0.0
    %486 = vmatprep.subr.mxu0 0.0
    %487 = vmatpush1.msra.mxu0 0.0
    %488 = vmatprep.subr.mxu0 0.0
    %489 = vmatpush1.msra.mxu0 0.0
    %490 = vmatprep.subr.mxu0 0.0
    %491 = vmatpush1.msra.mxu0 0.0
    %492 = vmatprep.subr.mxu0 0.0
    %493 = vmatpush1.msra.mxu0 0.0
    %494 = vmatprep.subr.mxu0 0.0
    %495 = vmatpush1.msra.mxu0 0.0
    %496 = vmatprep.subr.mxu0 0.0
    %497 = vmatpush1.msra.mxu0 0.0
    %498 = vmatprep.mubr.f32.mxu0 0.0
    %499 = vmatmul.mubr.f32.gmra.mrb[0].mxu0 %v432
    %v500 = vpop.f32.mrb[0].mxu0
    %v501 = vadd.f32 0.0, %v500
    %v502 = vpop.f32.mrb[0].mxu0
    %503 = vdwg.mxu0
    %v505 = vlaneseq
    %v506 = vshrl.u32 %v505, 7
    %v507 = vsub.s32 0, %v506
    %v508 = vrot.slane %v132, %v507
    %510 = vmatprep.subr.mxu0 0.0
    %511 = vmatpush1.msra.mxu0 %v501
    %512 = vmatprep.subr.mxu0 0.0
    %513 = vmatpush1.msra.mxu0 0.0
    %514 = vmatprep.subr.mxu0 0.0
    %515 = vmatpush1.msra.mxu0 0.0
    %516 = vmatprep.subr.mxu0 0.0
    %517 = vmatpush1.msra.mxu0 0.0
    %518 = vmatprep.subr.mxu0 0.0
    %519 = vmatpush1.msra.mxu0 0.0
    %520 = vmatprep.subr.mxu0 0.0
    %521 = vmatpush1.msra.mxu0 0.0
    %522 = vmatprep.subr.mxu0 0.0
    %523 = vmatpush1.msra.mxu0 0.0
    %524 = vmatprep.subr.mxu0 0.0
    %525 = vmatpush1.msra.mxu0 0.0
    %526 = vmatprep.subr.mxu0 0.0
    %527 = vmatpush1.msra.mxu0 0.0
    %528 = vmatprep.subr.mxu0 0.0
    %529 = vmatpush1.msra.mxu0 0.0
    %530 = vmatprep.subr.mxu0 0.0
    %531 = vmatpush1.msra.mxu0 0.0
    %532 = vmatprep.subr.mxu0 0.0
    %533 = vmatpush1.msra.mxu0 0.0
    %534 = vmatprep.subr.mxu0 0.0
    %535 = vmatpush1.msra.mxu0 0.0
    %536 = vmatprep.subr.mxu0 0.0
    %537 = vmatpush1.msra.mxu0 0.0
    %538 = vmatprep.subr.mxu0 0.0
    %539 = vmatpush1.msra.mxu0 0.0
    %540 = vmatprep.subr.mxu0 0.0
    %541 = vmatpush1.msra.mxu0 0.0
    %542 = vmatprep.subr.mxu0 0.0
    %543 = vmatpush1.msra.mxu0 0.0
    %544 = vmatprep.subr.mxu0 0.0
    %545 = vmatpush1.msra.mxu0 0.0
    %546 = vmatprep.subr.mxu0 0.0
    %547 = vmatpush1.msra.mxu0 0.0
    %548 = vmatprep.subr.mxu0 0.0
    %549 = vmatpush1.msra.mxu0 0.0
    %550 = vmatprep.subr.mxu0 0.0
    %551 = vmatpush1.msra.mxu0 0.0
    %552 = vmatprep.subr.mxu0 0.0
    %553 = vmatpush1.msra.mxu0 0.0
    %554 = vmatprep.subr.mxu0 0.0
    %555 = vmatpush1.msra.mxu0 0.0
    %556 = vmatprep.subr.mxu0 0.0
    %557 = vmatpush1.msra.mxu0 0.0
    %558 = vmatprep.subr.mxu0 0.0
    %559 = vmatpush1.msra.mxu0 0.0
    %560 = vmatprep.subr.mxu0 0.0
    %561 = vmatpush1.msra.mxu0 0.0
    %562 = vmatprep.subr.mxu0 0.0
    %563 = vmatpush1.msra.mxu0 0.0
    %564 = vmatprep.subr.mxu0 0.0
    %565 = vmatpush1.msra.mxu0 0.0
    %566 = vmatprep.subr.mxu0 0.0
    %567 = vmatpush1.msra.mxu0 0.0
    %568 = vmatprep.subr.mxu0 0.0
    %569 = vmatpush1.msra.mxu0 0.0
    %570 = vmatprep.subr.mxu0 0.0
    %571 = vmatpush1.msra.mxu0 0.0
    %572 = vmatprep.subr.mxu0 0.0
    %573 = vmatpush1.msra.mxu0 0.0
    %574 = vmatprep.mubr.f32.mxu0 0.0
    %575 = vmatmul.mubr.f32.gmra.mrb[0].mxu0 %v357
    %v576 = vpop.f32.mrb[0].mxu0
    %v577 = vadd.f32 %v508, %v576
    %v578 = vpop.f32.mrb[0].mxu0
    %579 = vdwg.mxu0
    %v580 = vld [vmem:[%s2] sm:$0xff]
    %v581 = vld [vmem:[%s2 + $0x8] sm:$0xff]
    %v582 = vld [vmem:[%s2 + $0x10] sm:$0xff]
    %v583 = vld [vmem:[%s2 + $0x18] sm:$0xff]
    %v584 = vld [vmem:[%s2 + $0x20] sm:$0xff]
    %v585 = vld [vmem:[%s2 + $0x28] sm:$0xff]
    %586 = vmatprep.subr.mxu0 0.0
    %587 = vmatpush1.msra.mxu0 %v31
    %588 = vmatprep.subr.mxu0 0.0
    %589 = vmatpush1.msra.mxu0 %v32
    %590 = vmatprep.subr.mxu0 0.0
    %591 = vmatpush1.msra.mxu0 %v33
    %592 = vmatprep.subr.mxu0 0.0
    %593 = vmatpush1.msra.mxu0 %v34
    %594 = vmatprep.subr.mxu0 0.0
    %595 = vmatpush1.msra.mxu0 %v35
    %596 = vmatprep.subr.mxu0 0.0
    %597 = vmatpush1.msra.mxu0 %v36
    %598 = vmatprep.subr.mxu0 0.0
    %599 = vmatpush1.msra.mxu0 %v37
    %600 = vmatprep.subr.mxu0 0.0
    %601 = vmatpush1.msra.mxu0 %v38
    %602 = vmatprep.subr.mxu0 0.0
    %603 = vmatpush1.msra.mxu0 %v39
    %604 = vmatprep.subr.mxu0 0.0
    %605 = vmatpush1.msra.mxu0 %v40
    %606 = vmatprep.subr.mxu0 0.0
    %607 = vmatpush1.msra.mxu0 %v41
    %608 = vmatprep.subr.mxu0 0.0
    %609 = vmatpush1.msra.mxu0 %v42
    %610 = vmatprep.subr.mxu0 0.0
    %611 = vmatpush1.msra.mxu0 %v43
    %612 = vmatprep.subr.mxu0 0.0
    %613 = vmatpush1.msra.mxu0 %v44
    %614 = vmatprep.subr.mxu0 0.0
    %615 = vmatpush1.msra.mxu0 %v45
    %616 = vmatprep.subr.mxu0 0.0
    %617 = vmatpush1.msra.mxu0 %v46
    %618 = vmatprep.subr.mxu0 0.0
    %619 = vmatpush1.msra.mxu0 %v47
    %620 = vmatprep.subr.mxu0 0.0
    %621 = vmatpush1.msra.mxu0 %v48
    %622 = vmatprep.subr.mxu0 0.0
    %623 = vmatpush1.msra.mxu0 %v49
    %624 = vmatprep.subr.mxu0 0.0
    %625 = vmatpush1.msra.mxu0 %v50
    %626 = vmatprep.subr.mxu0 0.0
    %627 = vmatpush1.msra.mxu0 %v51
    %628 = vmatprep.subr.mxu0 0.0
    %629 = vmatpush1.msra.mxu0 %v52
    %630 = vmatprep.subr.mxu0 0.0
    %631 = vmatpush1.msra.mxu0 %v53
    %632 = vmatprep.subr.mxu0 0.0
    %633 = vmatpush1.msra.mxu0 %v54
    %634 = vmatprep.subr.mxu0 0.0
    %635 = vmatpush1.msra.mxu0 %v55
    %636 = vmatprep.subr.mxu0 0.0
    %637 = vmatpush1.msra.mxu0 %v56
    %638 = vmatprep.subr.mxu0 0.0
    %639 = vmatpush1.msra.mxu0 %v57
    %640 = vmatprep.subr.mxu0 0.0
    %641 = vmatpush1.msra.mxu0 %v58
    %642 = vmatprep.subr.mxu0 0.0
    %643 = vmatpush1.msra.mxu0 %v59
    %644 = vmatprep.subr.mxu0 0.0
    %645 = vmatpush1.msra.mxu0 %v60
    %646 = vmatprep.subr.mxu0 0.0
    %647 = vmatpush1.msra.mxu0 %v61
    %648 = vmatprep.subr.mxu0 0.0
    %649 = vmatpush1.msra.mxu0 %v62
    %650 = vmatprep.mubr.f32.mxu0 %v581
    %651 = vmatmul.mubr.f32.gmra.mrb[0].mxu0 %v580
    %v652 = vpop.f32.mrb[0].mxu0
    %v653 = vadd.f32 0.0, %v652
    %v654 = vpop.f32.mrb[0].mxu0
    %655 = vdwg.mxu0
    %656 = vmatprep.subr.mxu0 0.0
    %657 = vmatpush1.msra.mxu0 %v63
    %658 = vmatprep.subr.mxu0 0.0
    %659 = vmatpush1.msra.mxu0 %v64
    %660 = vmatprep.subr.mxu0 0.0
    %661 = vmatpush1.msra.mxu0 %v65
    %662 = vmatprep.subr.mxu0 0.0
    %663 = vmatpush1.msra.mxu0 %v66
    %664 = vmatprep.subr.mxu0 0.0
    %665 = vmatpush1.msra.mxu0 %v67
    %666 = vmatprep.subr.mxu0 0.0
    %667 = vmatpush1.msra.mxu0 %v68
    %668 = vmatprep.subr.mxu0 0.0
    %669 = vmatpush1.msra.mxu0 %v69
    %670 = vmatprep.subr.mxu0 0.0
    %671 = vmatpush1.msra.mxu0 %v70
    %672 = vmatprep.subr.mxu0 0.0
    %673 = vmatpush1.msra.mxu0 %v71
    %674 = vmatprep.subr.mxu0 0.0
    %675 = vmatpush1.msra.mxu0 %v72
    %676 = vmatprep.subr.mxu0 0.0
    %677 = vmatpush1.msra.mxu0 %v73
    %678 = vmatprep.subr.mxu0 0.0
    %679 = vmatpush1.msra.mxu0 %v74
    %680 = vmatprep.subr.mxu0 0.0
    %681 = vmatpush1.msra.mxu0 %v75
    %682 = vmatprep.subr.mxu0 0.0
    %683 = vmatpush1.msra.mxu0 %v76
    %684 = vmatprep.subr.mxu0 0.0
    %685 = vmatpush1.msra.mxu0 %v77
    %686 = vmatprep.subr.mxu0 0.0
    %687 = vmatpush1.msra.mxu0 %v78
    %688 = vmatprep.subr.mxu0 0.0
    %689 = vmatpush1.msra.mxu0 %v79
    %690 = vmatprep.subr.mxu0 0.0
    %691 = vmatpush1.msra.mxu0 %v80
    %692 = vmatprep.subr.mxu0 0.0
    %693 = vmatpush1.msra.mxu0 %v81
    %694 = vmatprep.subr.mxu0 0.0
    %695 = vmatpush1.msra.mxu0 %v82
    %696 = vmatprep.subr.mxu0 0.0
    %697 = vmatpush1.msra.mxu0 %v83
    %698 = vmatprep.subr.mxu0 0.0
    %699 = vmatpush1.msra.mxu0 %v84
    %700 = vmatprep.subr.mxu0 0.0
    %701 = vmatpush1.msra.mxu0 %v85
    %702 = vmatprep.subr.mxu0 0.0
    %703 = vmatpush1.msra.mxu0 %v86
    %704 = vmatprep.subr.mxu0 0.0
    %705 = vmatpush1.msra.mxu0 %v87
    %706 = vmatprep.subr.mxu0 0.0
    %707 = vmatpush1.msra.mxu0 %v88
    %708 = vmatprep.subr.mxu0 0.0
    %709 = vmatpush1.msra.mxu0 %v89
    %710 = vmatprep.subr.mxu0 0.0
    %711 = vmatpush1.msra.mxu0 %v90
    %712 = vmatprep.subr.mxu0 0.0
    %713 = vmatpush1.msra.mxu0 %v91
    %714 = vmatprep.subr.mxu0 0.0
    %715 = vmatpush1.msra.mxu0 %v92
    %716 = vmatprep.subr.mxu0 0.0
    %717 = vmatpush1.msra.mxu0 %v93
    %718 = vmatprep.subr.mxu0 0.0
    %719 = vmatpush1.msra.mxu0 %v94
    %720 = vmatprep.mubr.f32.mxu0 %v583
    %721 = vmatmul.mubr.f32.gmra.mrb[0].mxu0 %v582
    %v722 = vpop.f32.mrb[0].mxu0
    %v723 = vadd.f32 %v653, %v722
    %v724 = vpop.f32.mrb[0].mxu0
    %725 = vdwg.mxu0
    %726 = vmatprep.subr.mxu0 0.0
    %727 = vmatpush1.msra.mxu0 %v95
    %728 = vmatprep.subr.mxu0 0.0
    %729 = vmatpush1.msra.mxu0 %v96
    %730 = vmatprep.subr.mxu0 0.0
    %731 = vmatpush1.msra.mxu0 %v97
    %732 = vmatprep.subr.mxu0 0.0
    %733 = vmatpush1.msra.mxu0 %v98
    %734 = vmatprep.subr.mxu0 0.0
    %735 = vmatpush1.msra.mxu0 %v99
    %736 = vmatprep.subr.mxu0 0.0
    %737 = vmatpush1.msra.mxu0 %v100
    %738 = vmatprep.subr.mxu0 0.0
    %739 = vmatpush1.msra.mxu0 %v101
    %740 = vmatprep.subr.mxu0 0.0
    %741 = vmatpush1.msra.mxu0 %v102
    %742 = vmatprep.subr.mxu0 0.0
    %743 = vmatpush1.msra.mxu0 %v103
    %744 = vmatprep.subr.mxu0 0.0
    %745 = vmatpush1.msra.mxu0 %v104
    %746 = vmatprep.subr.mxu0 0.0
    %747 = vmatpush1.msra.mxu0 %v105
    %748 = vmatprep.subr.mxu0 0.0
    %749 = vmatpush1.msra.mxu0 %v106
    %750 = vmatprep.subr.mxu0 0.0
    %751 = vmatpush1.msra.mxu0 %v107
    %752 = vmatprep.subr.mxu0 0.0
    %753 = vmatpush1.msra.mxu0 %v108
    %754 = vmatprep.subr.mxu0 0.0
    %755 = vmatpush1.msra.mxu0 %v109
    %756 = vmatprep.subr.mxu0 0.0
    %757 = vmatpush1.msra.mxu0 %v110
    %758 = vmatprep.subr.mxu0 0.0
    %759 = vmatpush1.msra.mxu0 %v111
    %760 = vmatprep.subr.mxu0 0.0
    %761 = vmatpush1.msra.mxu0 %v112
    %762 = vmatprep.subr.mxu0 0.0
    %763 = vmatpush1.msra.mxu0 %v113
    %764 = vmatprep.subr.mxu0 0.0
    %765 = vmatpush1.msra.mxu0 %v114
    %766 = vmatprep.subr.mxu0 0.0
    %767 = vmatpush1.msra.mxu0 %v115
    %768 = vmatprep.subr.mxu0 0.0
    %769 = vmatpush1.msra.mxu0 %v116
    %770 = vmatprep.subr.mxu0 0.0
    %771 = vmatpush1.msra.mxu0 %v117
    %772 = vmatprep.subr.mxu0 0.0
    %773 = vmatpush1.msra.mxu0 %v118
    %774 = vmatprep.subr.mxu0 0.0
    %775 = vmatpush1.msra.mxu0 %v119
    %776 = vmatprep.subr.mxu0 0.0
    %777 = vmatpush1.msra.mxu0 %v120
    %778 = vmatprep.subr.mxu0 0.0
    %779 = vmatpush1.msra.mxu0 %v121
    %780 = vmatprep.subr.mxu0 0.0
    %781 = vmatpush1.msra.mxu0 %v122
    %782 = vmatprep.subr.mxu0 0.0
    %783 = vmatpush1.msra.mxu0 %v123
    %784 = vmatprep.subr.mxu0 0.0
    %785 = vmatpush1.msra.mxu0 %v124
    %786 = vmatprep.subr.mxu0 0.0
    %787 = vmatpush1.msra.mxu0 %v125
    %788 = vmatprep.subr.mxu0 0.0
    %789 = vmatpush1.msra.mxu0 %v126
    %790 = vmatprep.mubr.f32.mxu0 %v585
    %791 = vmatmul.mubr.f32.gmra.mrb[0].mxu0 %v584
    %v792 = vpop.f32.mrb[0].mxu0
    %v793 = vadd.f32 %v723, %v792
    %v794 = vpop.f32.mrb[0].mxu0
    %795 = vdwg.mxu0
    %796 = vmatprep.subr.mxu0 0.0
    %797 = vmatpush1.msra.mxu0 %v793
    %798 = vmatprep.subr.mxu0 0.0
    %799 = vmatpush1.msra.mxu0 0.0
    %800 = vmatprep.subr.mxu0 0.0
    %801 = vmatpush1.msra.mxu0 0.0
    %802 = vmatprep.subr.mxu0 0.0
    %803 = vmatpush1.msra.mxu0 0.0
    %804 = vmatprep.subr.mxu0 0.0
    %805 = vmatpush1.msra.mxu0 0.0
    %806 = vmatprep.subr.mxu0 0.0
    %807 = vmatpush1.msra.mxu0 0.0
    %808 = vmatprep.subr.mxu0 0.0
    %809 = vmatpush1.msra.mxu0 0.0
    %810 = vmatprep.subr.mxu0 0.0
    %811 = vmatpush1.msra.mxu0 0.0
    %812 = vmatprep.subr.mxu0 0.0
    %813 = vmatpush1.msra.mxu0 0.0
    %814 = vmatprep.subr.mxu0 0.0
    %815 = vmatpush1.msra.mxu0 0.0
    %816 = vmatprep.subr.mxu0 0.0
    %817 = vmatpush1.msra.mxu0 0.0
    %818 = vmatprep.subr.mxu0 0.0
    %819 = vmatpush1.msra.mxu0 0.0
    %820 = vmatprep.subr.mxu0 0.0
    %821 = vmatpush1.msra.mxu0 0.0
    %822 = vmatprep.subr.mxu0 0.0
    %823 = vmatpush1.msra.mxu0 0.0
    %824 = vmatprep.subr.mxu0 0.0
    %825 = vmatpush1.msra.mxu0 0.0
    %826 = vmatprep.subr.mxu0 0.0
    %827 = vmatpush1.msra.mxu0 0.0
    %828 = vmatprep.subr.mxu0 0.0
    %829 = vmatpush1.msra.mxu0 0.0
    %830 = vmatprep.subr.mxu0 0.0
    %831 = vmatpush1.msra.mxu0 0.0
    %832 = vmatprep.subr.mxu0 0.0
    %833 = vmatpush1.msra.mxu0 0.0
    %834 = vmatprep.subr.mxu0 0.0
    %835 = vmatpush1.msra.mxu0 0.0
    %836 = vmatprep.subr.mxu0 0.0
    %837 = vmatpush1.msra.mxu0 0.0
    %838 = vmatprep.subr.mxu0 0.0
    %839 = vmatpush1.msra.mxu0 0.0
    %840 = vmatprep.subr.mxu0 0.0
    %841 = vmatpush1.msra.mxu0 0.0
    %842 = vmatprep.subr.mxu0 0.0
    %843 = vmatpush1.msra.mxu0 0.0
    %844 = vmatprep.subr.mxu0 0.0
    %845 = vmatpush1.msra.mxu0 0.0
    %846 = vmatprep.subr.mxu0 0.0
    %847 = vmatpush1.msra.mxu0 0.0
    %848 = vmatprep.subr.mxu0 0.0
    %849 = vmatpush1.msra.mxu0 0.0
    %850 = vmatprep.subr.mxu0 0.0
    %851 = vmatpush1.msra.mxu0 0.0
    %852 = vmatprep.subr.mxu0 0.0
    %853 = vmatpush1.msra.mxu0 0.0
    %854 = vmatprep.subr.mxu0 0.0
    %855 = vmatpush1.msra.mxu0 0.0
    %856 = vmatprep.subr.mxu0 0.0
    %857 = vmatpush1.msra.mxu0 0.0
    %858 = vmatprep.subr.mxu0 0.0
    %859 = vmatpush1.msra.mxu0 0.0
    %860 = vmatprep.mubr.f32.mxu0 0.0
    %861 = vmatmul.mubr.f32.gmra.mrb[0].mxu0 %v357
    %v862 = vpop.f32.mrb[0].mxu0
    %v863 = vadd.f32 %v353, %v862
    %v864 = vpop.f32.mrb[0].mxu0
    %865 = vdwg.mxu0
    %v866 = vmax.f32 %v863, 0.0
    %v868 = vsel %vm430, %v866, 0
    %870 = vmatprep.subr.mxu0 0.0
    %871 = vmatpush1.msra.mxu0 %v128
    %872 = vmatprep.subr.mxu0 0.0
    %873 = vmatpush1.msra.mxu0 %v129
    %874 = vmatprep.subr.mxu0 0.0
    %875 = vmatpush1.msra.mxu0 %v130
    %876 = vmatprep.subr.mxu0 0.0
    %877 = vmatpush1.msra.mxu0 %v131
    %878 = vmatprep.subr.mxu0 0.0
    %879 = vmatpush1.msra.mxu0 0.0
    %880 = vmatprep.subr.mxu0 0.0
    %881 = vmatpush1.msra.mxu0 0.0
    %882 = vmatprep.subr.mxu0 0.0
    %883 = vmatpush1.msra.mxu0 0.0
    %884 = vmatprep.subr.mxu0 0.0
    %885 = vmatpush1.msra.mxu0 0.0
    %886 = vmatprep.subr.mxu0 0.0
    %887 = vmatpush1.msra.mxu0 0.0
    %888 = vmatprep.subr.mxu0 0.0
    %889 = vmatpush1.msra.mxu0 0.0
    %890 = vmatprep.subr.mxu0 0.0
    %891 = vmatpush1.msra.mxu0 0.0
    %892 = vmatprep.subr.mxu0 0.0
    %893 = vmatpush1.msra.mxu0 0.0
    %894 = vmatprep.subr.mxu0 0.0
    %895 = vmatpush1.msra.mxu0 0.0
    %896 = vmatprep.subr.mxu0 0.0
    %897 = vmatpush1.msra.mxu0 0.0
    %898 = vmatprep.subr.mxu0 0.0
    %899 = vmatpush1.msra.mxu0 0.0
    %900 = vmatprep.subr.mxu0 0.0
    %901 = vmatpush1.msra.mxu0 0.0
    %902 = vmatprep.subr.mxu0 0.0
    %903 = vmatpush1.msra.mxu0 0.0
    %904 = vmatprep.subr.mxu0 0.0
    %905 = vmatpush1.msra.mxu0 0.0
    %906 = vmatprep.subr.mxu0 0.0
    %907 = vmatpush1.msra.mxu0 0.0
    %908 = vmatprep.subr.mxu0 0.0
    %909 = vmatpush1.msra.mxu0 0.0
    %910 = vmatprep.subr.mxu0 0.0
    %911 = vmatpush1.msra.mxu0 0.0
    %912 = vmatprep.subr.mxu0 0.0
    %913 = vmatpush1.msra.mxu0 0.0
    %914 = vmatprep.subr.mxu0 0.0
    %915 = vmatpush1.msra.mxu0 0.0
    %916 = vmatprep.subr.mxu0 0.0
    %917 = vmatpush1.msra.mxu0 0.0
    %918 = vmatprep.subr.mxu0 0.0
    %919 = vmatpush1.msra.mxu0 0.0
    %920 = vmatprep.subr.mxu0 0.0
    %921 = vmatpush1.msra.mxu0 0.0
    %922 = vmatprep.subr.mxu0 0.0
    %923 = vmatpush1.msra.mxu0 0.0
    %924 = vmatprep.subr.mxu0 0.0
    %925 = vmatpush1.msra.mxu0 0.0
    %926 = vmatprep.subr.mxu0 0.0
    %927 = vmatpush1.msra.mxu0 0.0
    %928 = vmatprep.subr.mxu0 0.0
    %929 = vmatpush1.msra.mxu0 0.0
    %930 = vmatprep.subr.mxu0 0.0
    %931 = vmatpush1.msra.mxu0 0.0
    %932 = vmatprep.subr.mxu0 0.0
    %933 = vmatpush1.msra.mxu0 0.0
    %934 = vmatprep.mubr.f32.mxu0 0.0
    %935 = vmatmul.mubr.f32.gmra.mrb[0].mxu0 %v868
    %v936 = vpop.f32.mrb[0].mxu0
    %v937 = vadd.f32 0.0, %v936
    %v938 = vpop.f32.mrb[0].mxu0
    %939 = vdwg.mxu0
    %940 = vmatprep.subr.mxu0 0.0
    %941 = vmatpush1.msra.mxu0 %v937
    %942 = vmatprep.subr.mxu0 0.0
    %943 = vmatpush1.msra.mxu0 0.0
    %944 = vmatprep.subr.mxu0 0.0
    %945 = vmatpush1.msra.mxu0 0.0
    %946 = vmatprep.subr.mxu0 0.0
    %947 = vmatpush1.msra.mxu0 0.0
    %948 = vmatprep.subr.mxu0 0.0
    %949 = vmatpush1.msra.mxu0 0.0
    %950 = vmatprep.subr.mxu0 0.0
    %951 = vmatpush1.msra.mxu0 0.0
    %952 = vmatprep.subr.mxu0 0.0
    %953 = vmatpush1.msra.mxu0 0.0
    %954 = vmatprep.subr.mxu0 0.0
    %955 = vmatpush1.msra.mxu0 0.0
    %956 = vmatprep.subr.mxu0 0.0
    %957 = vmatpush1.msra.mxu0 0.0
    %958 = vmatprep.subr.mxu0 0.0
    %959 = vmatpush1.msra.mxu0 0.0
    %960 = vmatprep.subr.mxu0 0.0
    %961 = vmatpush1.msra.mxu0 0.0
    %962 = vmatprep.subr.mxu0 0.0
    %963 = vmatpush1.msra.mxu0 0.0
    %964 = vmatprep.subr.mxu0 0.0
    %965 = vmatpush1.msra.mxu0 0.0
    %966 = vmatprep.subr.mxu0 0.0
    %967 = vmatpush1.msra.mxu0 0.0
    %968 = vmatprep.subr.mxu0 0.0
    %969 = vmatpush1.msra.mxu0 0.0
    %970 = vmatprep.subr.mxu0 0.0
    %971 = vmatpush1.msra.mxu0 0.0
    %972 = vmatprep.subr.mxu0 0.0
    %973 = vmatpush1.msra.mxu0 0.0
    %974 = vmatprep.subr.mxu0 0.0
    %975 = vmatpush1.msra.mxu0 0.0
    %976 = vmatprep.subr.mxu0 0.0
    %977 = vmatpush1.msra.mxu0 0.0
    %978 = vmatprep.subr.mxu0 0.0
    %979 = vmatpush1.msra.mxu0 0.0
    %980 = vmatprep.subr.mxu0 0.0
    %981 = vmatpush1.msra.mxu0 0.0
    %982 = vmatprep.subr.mxu0 0.0
    %983 = vmatpush1.msra.mxu0 0.0
    %984 = vmatprep.subr.mxu0 0.0
    %985 = vmatpush1.msra.mxu0 0.0
    %986 = vmatprep.subr.mxu0 0.0
    %987 = vmatpush1.msra.mxu0 0.0
    %988 = vmatprep.subr.mxu0 0.0
    %989 = vmatpush1.msra.mxu0 0.0
    %990 = vmatprep.subr.mxu0 0.0
    %991 = vmatpush1.msra.mxu0 0.0
    %992 = vmatprep.subr.mxu0 0.0
    %993 = vmatpush1.msra.mxu0 0.0
    %994 = vmatprep.subr.mxu0 0.0
    %995 = vmatpush1.msra.mxu0 0.0
    %996 = vmatprep.subr.mxu0 0.0
    %997 = vmatpush1.msra.mxu0 0.0
    %998 = vmatprep.subr.mxu0 0.0
    %999 = vmatpush1.msra.mxu0 0.0
    %1000 = vmatprep.subr.mxu0 0.0
    %1001 = vmatpush1.msra.mxu0 0.0
    %1002 = vmatprep.subr.mxu0 0.0
    %1003 = vmatpush1.msra.mxu0 0.0
    %1004 = vmatprep.mubr.f32.mxu0 0.0
    %1005 = vmatmul.mubr.f32.gmra.mrb[0].mxu0 %v357
    %v1006 = vpop.f32.mrb[0].mxu0
    %v1007 = vadd.f32 %v508, %v1006
    %v1008 = vpop.f32.mrb[0].mxu0
    %1009 = vdwg.mxu0
    %v1010 = vsel %vm430, %v577, 0.0
    %v1011 = vrot.slane %v1010, 4
    %v1012 = vadd.f32 %v1010, %v1011
    %v1013 = vrot.slane %v1012, 2
    %v1014 = vadd.f32 %v1012, %v1013
    %v1015 = vrot.slane %v1014, 1
    %v1016 = vadd.f32 %v1014, %v1015
    %v1017 = vrcp.pop 8.0
    %v1018 = vmul.f32 %v1016, %v1017
    %v1019 = vxor.u32 %v1018, 2147483648
    %v1020 = vmul.f32 %v1019, 1.442695
    %v1021 = vpow.pop %v1020
    %v1022 = vadd.f32 %v1021, 1.0
    %v1023 = vrcp.pop %v1022
    %v1024 = vmul.f32 1.0, %v1023
    %v1025 = vld [vmem:[%s7] sm:$0xff]
    %v1026 = vld [vmem:[%s7 + $0x8] sm:$0xff]
    %v1027 = vld [vmem:[%s7 + $0x10] sm:$0xff]
    %v1028 = vld [vmem:[%s7 + $0x18] sm:$0xff]
    %v1030 = vsel %vm430, %v1024, 0
    %v1033 = vsel %vm430, %v1025, 0
    %v1036 = vsel %vm430, %v1026, 0
    %v1039 = vsel %vm430, %v1027, 0
    %v1042 = vsel %vm430, %v1028, 0
    %1044 = vmatprep.subr.mxu0 0.0
    %1045 = vmatpush1.xpose.msra.mxu0 %v1033
    %1046 = vmatprep.subr.mxu0 0.0
    %1047 = vmatpush1.xpose.msra.mxu0 %v1036
    %1048 = vmatprep.subr.mxu0 0.0
    %1049 = vmatpush1.xpose.msra.mxu0 %v1039
    %1050 = vmatprep.subr.mxu0 0.0
    %1051 = vmatpush1.xpose.msra.mxu0 %v1042
    %1052 = vmatprep.subr.mxu0 0.0
    %1053 = vmatpush1.xpose.msra.mxu0 0.0
    %1054 = vmatprep.subr.mxu0 0.0
    %1055 = vmatpush1.xpose.msra.mxu0 0.0
    %1056 = vmatprep.subr.mxu0 0.0
    %1057 = vmatpush1.xpose.msra.mxu0 0.0
    %1058 = vmatprep.subr.mxu0 0.0
    %1059 = vmatpush1.xpose.msra.mxu0 0.0
    %1060 = vmatprep.subr.mxu0 0.0
    %1061 = vmatpush1.xpose.msra.mxu0 0.0
    %1062 = vmatprep.subr.mxu0 0.0
    %1063 = vmatpush1.xpose.msra.mxu0 0.0
    %1064 = vmatprep.subr.mxu0 0.0
    %1065 = vmatpush1.xpose.msra.mxu0 0.0
    %1066 = vmatprep.subr.mxu0 0.0
    %1067 = vmatpush1.xpose.msra.mxu0 0.0
    %1068 = vmatprep.subr.mxu0 0.0
    %1069 = vmatpush1.xpose.msra.mxu0 0.0
    %1070 = vmatprep.subr.mxu0 0.0
    %1071 = vmatpush1.xpose.msra.mxu0 0.0
    %1072 = vmatprep.subr.mxu0 0.0
    %1073 = vmatpush1.xpose.msra.mxu0 0.0
    %1074 = vmatprep.subr.mxu0 0.0
    %1075 = vmatpush1.xpose.msra.mxu0 0.0
    %1076 = vmatprep.subr.mxu0 0.0
    %1077 = vmatpush1.xpose.msra.mxu0 0.0
    %1078 = vmatprep.subr.mxu0 0.0
    %1079 = vmatpush1.xpose.msra.mxu0 0.0
    %1080 = vmatprep.subr.mxu0 0.0
    %1081 = vmatpush1.xpose.msra.mxu0 0.0
    %1082 = vmatprep.subr.mxu0 0.0
    %1083 = vmatpush1.xpose.msra.mxu0 0.0
    %1084 = vmatprep.subr.mxu0 0.0
    %1085 = vmatpush1.xpose.msra.mxu0 0.0
    %1086 = vmatprep.subr.mxu0 0.0
    %1087 = vmatpush1.xpose.msra.mxu0 0.0
    %1088 = vmatprep.subr.mxu0 0.0
    %1089 = vmatpush1.xpose.msra.mxu0 0.0
    %1090 = vmatprep.subr.mxu0 0.0
    %1091 = vmatpush1.xpose.msra.mxu0 0.0
    %1092 = vmatprep.subr.mxu0 0.0
    %1093 = vmatpush1.xpose.msra.mxu0 0.0
    %1094 = vmatprep.subr.mxu0 0.0
    %1095 = vmatpush1.xpose.msra.mxu0 0.0
    %1096 = vmatprep.subr.mxu0 0.0
    %1097 = vmatpush1.xpose.msra.mxu0 0.0
    %1098 = vmatprep.subr.mxu0 0.0
    %1099 = vmatpush1.xpose.msra.mxu0 0.0
    %1100 = vmatprep.subr.mxu0 0.0
    %1101 = vmatpush1.xpose.msra.mxu0 0.0
    %1102 = vmatprep.subr.mxu0 0.0
    %1103 = vmatpush1.xpose.msra.mxu0 0.0
    %1104 = vmatprep.subr.mxu0 0.0
    %1105 = vmatpush1.xpose.msra.mxu0 0.0
    %1106 = vmatprep.subr.mxu0 0.0
    %1107 = vmatpush1.xpose.msra.mxu0 0.0
    %1108 = vmatprep.mubr.f32.mxu0 0.0
    %1109 = vmatmul.mubr.f32.gmra.mrb[0].mxu0 %v1030
    %v1110 = vpop.f32.mrb[0].mxu0
    %v1111 = vadd.f32 0.0, %v1110
    %v1112 = vpop.f32.mrb[0].mxu0
    %1113 = vdwg.mxu0
    %v1114 = vlaneseq
    %v1115 = vshrl.u32 %v1114, 7
    %v1116 = vsub.s32 0, %v1115
    %v1117 = vrot.slane %v1111, %v1116
    %v1118 = vmul.f32 %v577, %v1117
    %v1119 = vsel %vm430, %v1118, 0.0
    %1120 = vadd.xlane.f32.xlu0 %v1119
    %v1121 = vpop.xlane.xlu0 %1120
    %v1122 = vmul.f32 %v1007, %v1117
    %v1123 = vsel %vm430, %v1122, 0.0
    %1124 = vadd.xlane.f32.xlu0 %v1123
    %v1125 = vpop.xlane.xlu0 %1124
    %v1126 = vsub.f32 0.0, %v1121
    %v1127 = vmax.f32 %v1126, 0.0
    %v1128 = vand.u32 2147483647, %v1126
    %v1129 = vsub.f32 0.0, %v1128
    %v1130 = vmul.f32 %v1129, 1.442695
    %v1131 = vpow.pop %v1130
    %v1132 = vadd.f32 %v1131, 1.0
    %v1133 = vlog2.pop %v1132
    %v1134 = vmul.f32 %v1133, 0.6931472
    %v1135 = vmul.f32 -0.5, %v1131
    %v1136 = vadd.f32 %v1135, 1.0
    %v1137 = vmul.f32 %v1136, %v1131
    %v1138 = vand.u32 2147483647, %v1131
    %vm1139 = vcmp.lt.f32.partialorder %v1138, 0.0004427343
    %v1140 = vsel %vm1139, %v1137, %v1134
    %v1141 = vadd.f32 %v1127, %v1140
    %vm1142 = vcmask 7168
    %v1143 = vsel %vm1142, %v1141, 0.0
    %1144 = vadd.xlane.f32.xlu0 %v1143
    %v1145 = vpop.xlane.xlu0 %1144
    %v1146 = vrot.slane %v1145, 4
    %v1147 = vadd.f32 %v1145, %v1146
    %v1148 = vrot.slane %v1147, 2
    %v1149 = vadd.f32 %v1147, %v1148
    %v1150 = vrot.slane %v1149, 1
    %v1151 = vadd.f32 %v1149, %v1150
    %s1152 = vtos %v1151
    %v1153 = vstv %s1152
    %v1154 = vmul.f32 %v1153, %v1017
    %v1155 = vmax.f32 %v1125, 0.0
    %v1156 = vand.u32 2147483647, %v1125
    %v1157 = vsub.f32 0.0, %v1156
    %v1158 = vmul.f32 %v1157, 1.442695
    %v1159 = vpow.pop %v1158
    %v1160 = vadd.f32 %v1159, 1.0
    %v1161 = vlog2.pop %v1160
    %v1162 = vmul.f32 %v1161, 0.6931472
    %v1163 = vmul.f32 -0.5, %v1159
    %v1164 = vadd.f32 %v1163, 1.0
    %v1165 = vmul.f32 %v1164, %v1159
    %v1166 = vand.u32 2147483647, %v1159
    %vm1167 = vcmp.lt.f32.partialorder %v1166, 0.0004427343
    %v1168 = vsel %vm1167, %v1165, %v1162
    %v1169 = vadd.f32 %v1155, %v1168
    %v1170 = vsel %vm1142, %v1169, 0.0
    %1171 = vadd.xlane.f32.xlu0 %v1170
    %v1172 = vpop.xlane.xlu0 %1171
    %v1173 = vrot.slane %v1172, 4
    %v1174 = vadd.f32 %v1172, %v1173
    %v1175 = vrot.slane %v1174, 2
    %v1176 = vadd.f32 %v1174, %v1175
    %v1177 = vrot.slane %v1176, 1
    %v1178 = vadd.f32 %v1176, %v1177
    %s1179 = vtos %v1178
    %v1180 = vstv %s1179
    %v1181 = vmul.f32 %v1180, %v1017
    %v1182 = vadd.f32 %v1154, %v1181
    %1183 = vst [vmem:[#allocation2] sm:$0x1] %v1182
    // Predicated region
    $region34: #{dgi_forward.3} parent=1 // pred_check
      _
    $region35: #{dgi_forward.3} parent=1 // pred_check_branch
      %1185 = sbr.rel (0) target = $region37
    $region36: #{dgi_forward.3} parent=1 // pred_region
      %s1187 = ssub.s32 16, 16
      %1188 = vsyncadd [#allocation3], %s1187
      %s1190 = sshll.u32 [#allocation2], 4
      %s1191 = int_to_ptr.vmem [resolvable:$true] %s1190
      %1193 = dma.vmem_to_hbm [thread:$0]  %s1191, 16, %s8, [#allocation3]
    $region37: #{dgi_forward.3} parent=1 // pred_fallthru
      _
    // Predicated region
    $region38: #{dgi_forward.3} parent=1 // pred_check
      _
    $region39: #{dgi_forward.3} parent=1 // pred_check_branch
      %1195 = sbr.rel (0) target = $region41
    $region40: #{dgi_forward.3} parent=1 // pred_region
      %1196 = dma.done [#allocation3], 16
    $region41: #{dgi_forward.3} parent=1 // pred_fallthru
      _
    %1197 = vsyncpa [#allocation3], 1

</llo_original>
